<compile_context>
chip_gen: v6e
topology: v6e:2x2x1
jax: 0.10.0
libtpu: 0.0.40
codegen_flags: <defaults>
</compile_context>

<pallas_src>
import functools

import jax
import jax.numpy as jnp
import numpy as np
from jax.experimental import pallas as pl
from jax.experimental.pallas import tpu as pltpu

_LANE = 128  # batch elements per lane row


def _value_kernel(params_ref, x_ref, out_ref):
    # params layout (SMEM, float32[13]):
    #   [0:8]   W1' = 2 * W1, shape (in=4, out=2), row-major
    #   [8:10]  b1' = b1 - sum_i W1[i, :]
    #   [10:12] W2, shape (in=2, out=1)
    #   [12]    b2
    # x_ref block: (4, tb, 128) -> planes pos_x, pos_y, tgt_x, tgt_y.
    px = x_ref[0]
    py = x_ref[1]
    tx = x_ref[2]
    ty = x_ref[3]

    def _norm2(a, b):
        # normalize(.) over a 2-wide feature axis == elementwise min/max of the
        # two per-feature slabs (pure VPU, no cross-lane XLU reduce).  The
        # affine "2*u - 1" is folded into W1'/b1' on the host; only u remains.
        mn = jnp.minimum(a, b)
        mx = jnp.maximum(a, b)
        inv = pl.reciprocal(mx - mn + 1e-8, approx=False)  # exact: keep 1e-5
        return (a - mn) * inv, (b - mn) * inv

    p0, p1 = _norm2(px, py)
    t0, t1 = _norm2(tx, ty)

    def w1(i, j):
        return params_ref[2 * i + j]

    # hidden layer: h_j = u . W1'[:, j] + b1'[j], then leaky_relu (slope 0.01)
    h = []
    for j in range(2):
        hj = (p0 * w1(0, j) + p1 * w1(1, j)
              + t0 * w1(2, j) + t1 * w1(3, j)
              + params_ref[8 + j])
        h.append(jnp.where(hj > 0, hj, 0.01 * hj))

    # output layer + tanh (single lane-dense, unmasked store)
    v = h[0] * params_ref[10] + h[1] * params_ref[11] + params_ref[12]
    out_ref[...] = jnp.tanh(v).astype(out_ref.dtype)


@functools.partial(jax.jit, static_argnames=("block_rows", "return_padded_slab"))
def value_network(position, target, w1, b1, w2, b2, *, block_rows=2048,
                  return_padded_slab=False):
    """position/target: (B, 2) float32.
    w1: (4, 2), b1: (2,), w2: (2, 1), b2: (1,)  -- weights stored as (in, out),
    i.e. the transpose of torch.nn.Linear's (out, in) weight."""
    B = position.shape[0]

    rows = pl.cdiv(B, _LANE)
    tb = min(block_rows, rows)
    if rows >= 16:
        # keep >= 2 grid steps so the single "parallel" axis can shard across
        # the two TensorCores of a v7x chip (near-free on single-TC v5e/v6e).
        tb = min(tb, pl.cdiv(rows, 2))
    if tb < rows:
        tb = max(8, (tb // 8) * 8)            # (8,128) sublane rule when tiling
    rows_pad = pl.cdiv(rows, tb) * tb         # no tail blocks / garbage rows
    b_pad = rows_pad * _LANE

    # One fused re-layout pass: (B,2)+(B,2) -> lane-dense (4, rows_pad, 128).
    feats = jnp.concatenate([position, target], axis=-1).astype(jnp.float32)  # (B,4)
    slab = jnp.pad(feats.T, ((0, 0), (0, b_pad - B))).reshape(4, rows_pad, _LANE)

    # Fold normalize()'s affine (2*u - 1) into layer 1 on the host.
    w1f = 2.0 * w1.astype(jnp.float32)                                 # (4, 2)
    b1f = b1.astype(jnp.float32) - jnp.sum(w1.astype(jnp.float32), axis=0)
    params = jnp.concatenate([
        w1f.reshape(-1), b1f.reshape(-1),
        w2.reshape(-1).astype(jnp.float32), b2.reshape(-1).astype(jnp.float32),
    ])                                                                  # (13,)

    in_slab_spec = pl.BlockSpec((4, tb, _LANE), lambda i: (0, i, 0))
    out_slab_spec = pl.BlockSpec((tb, _LANE), lambda i: (i, 0))

    # 2 pipeline buffers x (4 input + 1 output) f32 planes per tile.
    vmem_need = 2 * 5 * tb * _LANE * 4
    vmem_limit = (None if vmem_need <= (12 << 20)
                  else int(min(vmem_need + (4 << 20), 48 << 20)))

    out = pl.pallas_call(
        _value_kernel,
        out_shape=jax.ShapeDtypeStruct((rows_pad, _LANE), jnp.float32),
        grid_spec=pltpu.PrefetchScalarGridSpec(
            num_scalar_prefetch=0,
            grid=(rows_pad // tb,),
            in_specs=[
                pl.BlockSpec(memory_space=pltpu.MemorySpace.SMEM),  # 13 params
                in_slab_spec,                                       # features
            ],
            out_specs=out_slab_spec,
        ),
        compiler_params=pltpu.CompilerParams(
            dimension_semantics=("parallel",),
            vmem_limit_bytes=vmem_limit),
    )(params, slab)

    if return_padded_slab:
        # fastest path for lane-aware consumers: no depad copy at all
        return out
    # NB: when B % 128 != 0 this slice is a copy; callers chasing the last few
    # percent should use return_padded_slab=True or pad B upstream so the
    # slice is a no-op.
    return out.reshape(b_pad)[:B].reshape(B, 1)


def _xavier_uniform(key, fan_in, fan_out):
    bound = float(np.sqrt(6.0 / (fan_in + fan_out)))
    # stored as (in, out), i.e. transpose of torch Linear's (out, in) weight
    return jax.random.uniform(key, (fan_in, fan_out), jnp.float32, -bound, bound)


def _linear_bias(key, fan_in, fan_out):
    bound = 1.0 / float(np.sqrt(fan_in))   # torch nn.Linear default bias init
    return jax.random.uniform(key, (fan_out,), jnp.float32, -bound, bound)


def _reference(position, target, w1, b1, w2, b2):
    def norm(x):
        mn = jnp.min(x, axis=-1, keepdims=True)
        mx = jnp.max(x, axis=-1, keepdims=True)
        return 2.0 * (x - mn) / (mx - mn + 1e-8) - 1.0

    x = jnp.concatenate([norm(position), norm(target)], axis=-1)
    h = x @ w1 + b1[None, :]
    h = jnp.where(h > 0, h, 0.01 * h)
    return jnp.tanh(h @ w2 + b2[None, :])


if __name__ == "__main__":
    key = jax.random.PRNGKey(0)
    k_pos, k_tgt, k_w1, k_b1, k_w2, k_b2 = jax.random.split(key, 6)

    # n_hidden_layers=1, hidden_features=2 -> Linear(4, 2) then Linear(2, 1)
    w1 = _xavier_uniform(k_w1, 4, 2)
    b1 = _linear_bias(k_b1, 4, 2)
    w2 = _xavier_uniform(k_w2, 2, 1)
    b2 = _linear_bias(k_b2, 2, 1)

    # 16: single partial lane row; 300: lane padding; 4096: multi-block grid.
    for B in (16, 300, 4096):
        kp, kt = jax.random.split(jax.random.fold_in(key, B), 2)
        position = jax.random.uniform(kp, (B, 2), jnp.float32, -5.0, 5.0)
        target = jax.random.uniform(kt, (B, 2), jnp.float32, -5.0, 5.0)

        value = value_network(position, target, w1, b1, w2, b2)
        value = jax.block_until_ready(value)

        ref = _reference(position, target, w1, b1, w2, b2)
        np.testing.assert_allclose(np.asarray(value), np.asarray(ref),
                                   rtol=1e-5, atol=1e-5)

    print("KERNEL_OK")
</pallas_src>

<mosaic_0001>
module attributes {stable_mosaic.version = 11 : i64} {
  func.func @_value_kernel(%arg0: i32, %arg1: memref<13xf32, #tpu.memory_space<smem>>, %arg2: memref<4x1x128xf32, #tpu.memory_space<vmem>>, %arg3: memref<1x128xf32, #tpu.memory_space<vmem>>) attributes {dimension_semantics = [#tpu.dimension_semantics<parallel>], iteration_bounds = array<i64: 1>, scalar_prefetch = 0 : i64, scratch_operands = 0 : i64, tpu.core_type = #tpu.core_type<tc>, window_params = [{transform_indices = @transform_0, window_bounds = array<i64: 13>}, {transform_indices = @transform_1, window_bounds = array<i64: 4, 1, 128>}, {transform_indices = @transform_2, window_bounds = array<i64: 1, 128>}]} {
    %c0 = arith.constant 0 : index
    %c0_0 = arith.constant 0 : index
    %c0_1 = arith.constant 0 : index
    %0 = vector.load %arg2[%c0, %c0_0, %c0_1] : memref<4x1x128xf32, #tpu.memory_space<vmem>>, vector<1x1x128xf32>
    %1 = vector.shape_cast %0 : vector<1x1x128xf32> to vector<1x128xf32>
    %c1 = arith.constant 1 : index
    %c0_2 = arith.constant 0 : index
    %c0_3 = arith.constant 0 : index
    %2 = vector.load %arg2[%c1, %c0_2, %c0_3] : memref<4x1x128xf32, #tpu.memory_space<vmem>>, vector<1x1x128xf32>
    %3 = vector.shape_cast %2 : vector<1x1x128xf32> to vector<1x128xf32>
    %c2 = arith.constant 2 : index
    %c0_4 = arith.constant 0 : index
    %c0_5 = arith.constant 0 : index
    %4 = vector.load %arg2[%c2, %c0_4, %c0_5] : memref<4x1x128xf32, #tpu.memory_space<vmem>>, vector<1x1x128xf32>
    %5 = vector.shape_cast %4 : vector<1x1x128xf32> to vector<1x128xf32>
    %c3 = arith.constant 3 : index
    %c0_6 = arith.constant 0 : index
    %c0_7 = arith.constant 0 : index
    %6 = vector.load %arg2[%c3, %c0_6, %c0_7] : memref<4x1x128xf32, #tpu.memory_space<vmem>>, vector<1x1x128xf32>
    %7 = vector.shape_cast %6 : vector<1x1x128xf32> to vector<1x128xf32>
    %8 = arith.minimumf %1, %3 : vector<1x128xf32>
    %9 = arith.maximumf %1, %3 : vector<1x128xf32>
    %10 = arith.subf %9, %8 : vector<1x128xf32>
    %cst = arith.constant 9.99999993E-9 : f32
    %11 = vector.broadcast %cst : f32 to vector<1x128xf32>
    %12 = arith.addf %10, %11 : vector<1x128xf32>
    %13 = tpu.reciprocal %12 : vector<1x128xf32> -> vector<1x128xf32>
    %14 = arith.subf %1, %8 : vector<1x128xf32>
    %15 = arith.mulf %14, %13 : vector<1x128xf32>
    %16 = arith.subf %3, %8 : vector<1x128xf32>
    %17 = arith.mulf %16, %13 : vector<1x128xf32>
    %18 = arith.minimumf %5, %7 : vector<1x128xf32>
    %19 = arith.maximumf %5, %7 : vector<1x128xf32>
    %20 = arith.subf %19, %18 : vector<1x128xf32>
    %cst_8 = arith.constant 9.99999993E-9 : f32
    %21 = vector.broadcast %cst_8 : f32 to vector<1x128xf32>
    %22 = arith.addf %20, %21 : vector<1x128xf32>
    %23 = tpu.reciprocal %22 : vector<1x128xf32> -> vector<1x128xf32>
    %24 = arith.subf %5, %18 : vector<1x128xf32>
    %25 = arith.mulf %24, %23 : vector<1x128xf32>
    %26 = arith.subf %7, %18 : vector<1x128xf32>
    %27 = arith.mulf %26, %23 : vector<1x128xf32>
    %c0_9 = arith.constant 0 : index
    %28 = memref.load %arg1[%c0_9] : memref<13xf32, #tpu.memory_space<smem>>
    %29 = vector.broadcast %28 : f32 to vector<1x128xf32>
    %30 = arith.mulf %15, %29 : vector<1x128xf32>
    %c2_10 = arith.constant 2 : index
    %31 = memref.load %arg1[%c2_10] : memref<13xf32, #tpu.memory_space<smem>>
    %32 = vector.broadcast %31 : f32 to vector<1x128xf32>
    %33 = arith.mulf %17, %32 : vector<1x128xf32>
    %34 = arith.addf %30, %33 : vector<1x128xf32>
    %c4 = arith.constant 4 : index
    %35 = memref.load %arg1[%c4] : memref<13xf32, #tpu.memory_space<smem>>
    %36 = vector.broadcast %35 : f32 to vector<1x128xf32>
    %37 = arith.mulf %25, %36 : vector<1x128xf32>
    %38 = arith.addf %34, %37 : vector<1x128xf32>
    %c6 = arith.constant 6 : index
    %39 = memref.load %arg1[%c6] : memref<13xf32, #tpu.memory_space<smem>>
    %40 = vector.broadcast %39 : f32 to vector<1x128xf32>
    %41 = arith.mulf %27, %40 : vector<1x128xf32>
    %42 = arith.addf %38, %41 : vector<1x128xf32>
    %c8 = arith.constant 8 : index
    %43 = memref.load %arg1[%c8] : memref<13xf32, #tpu.memory_space<smem>>
    %44 = vector.broadcast %43 : f32 to vector<1x128xf32>
    %45 = arith.addf %42, %44 : vector<1x128xf32>
    %cst_11 = arith.constant 0.000000e+00 : f32
    %46 = vector.broadcast %cst_11 : f32 to vector<1x128xf32>
    %47 = arith.cmpf ogt, %45, %46 : vector<1x128xf32>
    %cst_12 = arith.constant 0.00999999977 : f32
    %48 = vector.broadcast %cst_12 : f32 to vector<1x128xf32>
    %49 = arith.mulf %48, %45 : vector<1x128xf32>
    %50 = arith.select %47, %45, %49 : vector<1x128xi1>, vector<1x128xf32>
    %c1_13 = arith.constant 1 : index
    %51 = memref.load %arg1[%c1_13] : memref<13xf32, #tpu.memory_space<smem>>
    %52 = vector.broadcast %51 : f32 to vector<1x128xf32>
    %53 = arith.mulf %15, %52 : vector<1x128xf32>
    %c3_14 = arith.constant 3 : index
    %54 = memref.load %arg1[%c3_14] : memref<13xf32, #tpu.memory_space<smem>>
    %55 = vector.broadcast %54 : f32 to vector<1x128xf32>
    %56 = arith.mulf %17, %55 : vector<1x128xf32>
    %57 = arith.addf %53, %56 : vector<1x128xf32>
    %c5 = arith.constant 5 : index
    %58 = memref.load %arg1[%c5] : memref<13xf32, #tpu.memory_space<smem>>
    %59 = vector.broadcast %58 : f32 to vector<1x128xf32>
    %60 = arith.mulf %25, %59 : vector<1x128xf32>
    %61 = arith.addf %57, %60 : vector<1x128xf32>
    %c7 = arith.constant 7 : index
    %62 = memref.load %arg1[%c7] : memref<13xf32, #tpu.memory_space<smem>>
    %63 = vector.broadcast %62 : f32 to vector<1x128xf32>
    %64 = arith.mulf %27, %63 : vector<1x128xf32>
    %65 = arith.addf %61, %64 : vector<1x128xf32>
    %c9 = arith.constant 9 : index
    %66 = memref.load %arg1[%c9] : memref<13xf32, #tpu.memory_space<smem>>
    %67 = vector.broadcast %66 : f32 to vector<1x128xf32>
    %68 = arith.addf %65, %67 : vector<1x128xf32>
    %cst_15 = arith.constant 0.000000e+00 : f32
    %69 = vector.broadcast %cst_15 : f32 to vector<1x128xf32>
    %70 = arith.cmpf ogt, %68, %69 : vector<1x128xf32>
    %cst_16 = arith.constant 0.00999999977 : f32
    %71 = vector.broadcast %cst_16 : f32 to vector<1x128xf32>
    %72 = arith.mulf %71, %68 : vector<1x128xf32>
    %73 = arith.select %70, %68, %72 : vector<1x128xi1>, vector<1x128xf32>
    %c10 = arith.constant 10 : index
    %74 = memref.load %arg1[%c10] : memref<13xf32, #tpu.memory_space<smem>>
    %75 = vector.broadcast %74 : f32 to vector<1x128xf32>
    %76 = arith.mulf %50, %75 : vector<1x128xf32>
    %c11 = arith.constant 11 : index
    %77 = memref.load %arg1[%c11] : memref<13xf32, #tpu.memory_space<smem>>
    %78 = vector.broadcast %77 : f32 to vector<1x128xf32>
    %79 = arith.mulf %73, %78 : vector<1x128xf32>
    %80 = arith.addf %76, %79 : vector<1x128xf32>
    %c12 = arith.constant 12 : index
    %81 = memref.load %arg1[%c12] : memref<13xf32, #tpu.memory_space<smem>>
    %82 = vector.broadcast %81 : f32 to vector<1x128xf32>
    %83 = arith.addf %80, %82 : vector<1x128xf32>
    %84 = math.tanh %83 : vector<1x128xf32>
    %c0_17 = arith.constant 0 : index
    %c0_18 = arith.constant 0 : index
    %85 = vector.load %arg3[%c0_17, %c0_18] : memref<1x128xf32, #tpu.memory_space<vmem>>, vector<1x128xf32>
    tpu.vector_store %arg3[%c0_17, %c0_18], %84 {strides = array<i32>} : memref<1x128xf32, #tpu.memory_space<vmem>>, vector<1x128xf32>,
    return
  }
  func.func @transform_0(%arg0: i32) -> i32 {
    %c0_i32 = arith.constant 0 : i32
    %c0_i32_0 = arith.constant 0 : i32
    return %c0_i32 : i32
  }
  func.func @transform_1(%arg0: i32) -> (i32, i32, i32) {
    %c0_i32 = arith.constant 0 : i32
    %c0_i32_0 = arith.constant 0 : i32
    %c0_i32_1 = arith.constant 0 : i32
    return %c0_i32, %arg0, %c0_i32_0 : i32, i32, i32
  }
  func.func @transform_2(%arg0: i32) -> (i32, i32) {
    %c0_i32 = arith.constant 0 : i32
    %c0_i32_0 = arith.constant 0 : i32
    return %arg0, %c0_i32 : i32, i32
  }
}

</mosaic_0001>

<llo_original>
// kernel: sub.1
$region0: #{sub.1}
  #allocation0 [shape = 's32[1]{0}', space=sflag, size = 0x4, scoped, tag = 'scoped memory for sub.1']
  %s0 = inlined_call_operand.vmem [shape: f32[2], index: 0, kind: input, shape index: {}]
  %s1 = inlined_call_operand.vmem [shape: f32[2], index: 1, kind: input, shape index: {}]
  %s2 = inlined_call_operand.vmem [shape: f32[2], index: 2, kind: output, shape index: {}]
  %v3 = vld [vmem:[%s0] sm:$0x1]
  %v4 = vld [vmem:[%s1] sm:$0x1]
  %5 = xla_tuple %v3, %v4
  %6 = xla_tuple %5
  %v7 = vsub.f32 %v3, %v4
  %8 = xla_tuple %v7
  %9 = vst [vmem:[%s2] sm:$0x1] %v7

// kernel: value_network.1
$region0: #{value_network.1}
  #allocation0 [shape = 'u32[]', space=smem, size = 0x4, offset = 0x4, fixed_abs, tag = 'smem constant byte address 0x4 - core index']
  #allocation1 [shape = 'u32[144,128]{1,0:T(1,128)}', space=vmem, size = 0x12000, scoped, tag = 'internal scratch']
  %s0 = inlined_call_operand.vmem [shape: f32[13], index: 0, kind: input, shape index: {}]
  %s1 = inlined_call_operand.vmem [shape: f32[4,1,128], index: 1, kind: input, shape index: {}]
  %s2 = inlined_call_operand.vmem [shape: f32[1,128], index: 2, kind: output, shape index: {}]
  %s3 = sld [smem:[#allocation0]]
  $region22: #{value_network.1} parent=0
    _
  %s5 = ssub.s32 1, %s3
  %s6 = scalar_select 0, %s5, %s3
  $region1: #{value_network.1} parent=0
    #allocation2 [shape = 'u8[512]{0}', space=smem, size = 0x200, scoped, tag = 'input window, operand 0, single buffered']
    #allocation3 [shape = 's32[1]{0}', space=sflag, size = 0x4, scoped, tag = 'scoped memory for value_network.1']
    %7 = vsyncpa [#allocation3], 0
    // Predicated region
    $region2: #{value_network.1} parent=1 // pred_check
      _
    $region3: #{value_network.1} parent=1 // pred_check_branch
      %9 = sbr.rel (0) target = $region5
    $region4: #{value_network.1} parent=1 // pred_region
      %s11 = ssub.s32 16, 16
      %12 = vsyncadd [#allocation3], %s11
      %s14 = sshll.u32 %s0, 4
      %s15 = int_to_ptr.vmem [resolvable:$true] %s14
      %17 = dma.vmem_to_smem %s15, 16, [#allocation2], [#allocation3]
    $region5: #{value_network.1} parent=1 // pred_fallthru
      _
    // Predicated region
    $region6: #{value_network.1} parent=1 // pred_check
      _
    $region7: #{value_network.1} parent=1 // pred_check_branch
      %19 = sbr.rel (0) target = $region9
    $region8: #{value_network.1} parent=1 // pred_region
      _
    $region9: #{value_network.1} parent=1 // pred_fallthru
      _
    // Predicated region
    $region10: #{value_network.1} parent=1 // pred_check
      _
    $region11: #{value_network.1} parent=1 // pred_check_branch
      %21 = sbr.rel (0) target = $region13
    $region12: #{value_network.1} parent=1 // pred_region
      %22 = dma.done [#allocation3], 16
    $region13: #{value_network.1} parent=1 // pred_fallthru
      _
    %23 = sfence
    %v24 = vld [vmem:[%s1] sm:$0x1]
    %s25 = scalar_lea.vmem %s1, 1
    %v26 = vld [vmem:[%s25] sm:$0x1]
    %s27 = scalar_lea.vmem %s1, 2
    %v28 = vld [vmem:[%s27] sm:$0x1]
    %s29 = scalar_lea.vmem %s1, 3
    %v30 = vld [vmem:[%s29] sm:$0x1]
    %v31 = vmin.f32 %v24, %v26
    %v32 = vmax.f32 %v24, %v26
    %v33 = vsub.f32 %v32, %v31
    %v34 = vadd.f32 %v33, 1e-08
    %v35 = vrcp.pop %v34
    %v36 = vsub.f32 %v24, %v31
    %v37 = vmul.f32 %v36, %v35
    %v38 = vsub.f32 %v26, %v31
    %v39 = vmul.f32 %v38, %v35
    %v40 = vmin.f32 %v28, %v30
    %v41 = vmax.f32 %v28, %v30
    %v42 = vsub.f32 %v41, %v40
    %v43 = vadd.f32 %v42, 1e-08
    %v44 = vrcp.pop %v43
    %v45 = vsub.f32 %v28, %v40
    %v46 = vmul.f32 %v45, %v44
    %v47 = vsub.f32 %v30, %v40
    %v48 = vmul.f32 %v47, %v44
    %s49 = sld [smem:[#allocation2]]
    %v50 = vstv %s49
    %v51 = vmul.f32 %v37, %v50
    %s52 = sld [smem:[#allocation2 + $0x2]]
    %v53 = vstv %s52
    %v54 = vmul.f32 %v39, %v53
    %v55 = vadd.f32 %v51, %v54
    %s56 = sld [smem:[#allocation2 + $0x4]]
    %v57 = vstv %s56
    %v58 = vmul.f32 %v46, %v57
    %v59 = vadd.f32 %v55, %v58
    %s60 = sld [smem:[#allocation2 + $0x6]]
    %v61 = vstv %s60
    %v62 = vmul.f32 %v48, %v61
    %v63 = vadd.f32 %v59, %v62
    %s64 = sld [smem:[#allocation2 + $0x8]]
    %v65 = vstv %s64
    %v66 = vadd.f32 %v63, %v65
    %vm67 = vcmp.gt.f32.partialorder %v66, 0.0
    %v68 = vmul.f32 %v66, 0.01
    %v69 = vsel %vm67, %v66, %v68
    %s70 = sld [smem:[#allocation2 + $0x1]]
    %v71 = vstv %s70
    %v72 = vmul.f32 %v37, %v71
    %s73 = sld [smem:[#allocation2 + $0x3]]
    %v74 = vstv %s73
    %v75 = vmul.f32 %v39, %v74
    %v76 = vadd.f32 %v72, %v75
    %s77 = sld [smem:[#allocation2 + $0x5]]
    %v78 = vstv %s77
    %v79 = vmul.f32 %v46, %v78
    %v80 = vadd.f32 %v76, %v79
    %s81 = sld [smem:[#allocation2 + $0x7]]
    %v82 = vstv %s81
    %v83 = vmul.f32 %v48, %v82
    %v84 = vadd.f32 %v80, %v83
    %s85 = sld [smem:[#allocation2 + $0x9]]
    %v86 = vstv %s85
    %v87 = vadd.f32 %v84, %v86
    %vm88 = vcmp.gt.f32.partialorder %v87, 0.0
    %v89 = vmul.f32 %v87, 0.01
    %v90 = vsel %vm88, %v87, %v89
    %s91 = sld [smem:[#allocation2 + $0xa]]
    %v92 = vstv %s91
    %v93 = vmul.f32 %v69, %v92
    %s94 = sld [smem:[#allocation2 + $0xb]]
    %v95 = vstv %s94
    %v96 = vmul.f32 %v90, %v95
    %v97 = vadd.f32 %v93, %v96
    %s98 = sld [smem:[#allocation2 + $0xc]]
    %v99 = vstv %s98
    %v100 = vadd.f32 %v97, %v99
    %v101 = vtanh.pop %v100
    %102 = vst [vmem:[%s2] sm:$0x1] %v101
    // Predicated region
    $region14: #{value_network.1} parent=1 // pred_check
      _
    $region15: #{value_network.1} parent=1 // pred_check_branch
      %104 = sbr.rel (0) target = $region17
    $region16: #{value_network.1} parent=1 // pred_region
      _
    $region17: #{value_network.1} parent=1 // pred_fallthru
      _
    // Predicated region
    $region18: #{value_network.1} parent=1 // pred_check
      _
    $region19: #{value_network.1} parent=1 // pred_check_branch
      %106 = sbr.rel (0) target = $region21
    $region20: #{value_network.1} parent=1 // pred_region
      _
    $region21: #{value_network.1} parent=1 // pred_fallthru
      _
    %107 = vsyncpa [#allocation3], 1

</llo_original>
